<compile_context>
chip_gen: v7x
topology: tpu7x:2x2x1
jax: 0.10.0
libtpu: 0.0.40
codegen_flags: <defaults>
</compile_context>

<pallas_src>
import functools

import jax
import jax.numpy as jnp
from jax.experimental import pallas as pl
from jax.experimental.pallas import tpu as pltpu

_LANES = 128


def _round_up(x, m):
    return (x + m - 1) // m * m


def _accuracy_kernel(logits_ref, tgt_ref, acc_ref, count_ref, *, n_total):
    # logits_ref: (tile_n, C) float logits
    # tgt_ref:    (tile_n, 128) int32 labels (lane-replicated; lane 0 is real)
    # acc_ref:    (1, 1) float32 output (accuracy), written on last step only
    # count_ref:  (1, 1) int32 VMEM scratch accumulator (exact for any N)
    i = pl.program_id(0)

    @pl.when(i == 0)
    def _init():
        count_ref[...] = jnp.zeros_like(count_ref)

    logits = logits_ref[...]                         # (tile_n, C)
    tile_n, c = logits.shape

    # First-occurrence argmax over the class (lane) axis, matching torch.argmax.
    # TODO(synk): rows containing NaN are counted as incorrect here, whereas
    # torch.argmax would return the NaN position.
    maxv = jnp.max(logits, axis=-1, keepdims=True)                   # (tile_n, 1)
    lane_idx = jax.lax.broadcasted_iota(jnp.int32, (tile_n, c), 1)
    cand = jnp.where(logits == maxv, lane_idx, jnp.int32(c))
    pred = jnp.min(cand, axis=-1, keepdims=True)                     # (tile_n, 1)

    # Lane 0 of the replicated target block holds the real label.
    tgt = tgt_ref[:, 0:1]                                            # (tile_n, 1)

    # Mask rows beyond the true batch size (ragged last tile / stale VMEM).
    row_idx = jax.lax.broadcasted_iota(jnp.int32, (tile_n, 1), 0)
    valid = (i * tile_n + row_idx) < n_total

    correct = (valid & (pred == tgt)).astype(jnp.int32)              # (tile_n, 1)
    count_ref[...] = count_ref[...] + jnp.sum(correct, axis=0, keepdims=True)

    @pl.when(i == pl.num_programs(0) - 1)
    def _finalize():
        # Divide by the true global N (not the block-local row count).
        acc_ref[...] = count_ref[...].astype(jnp.float32) * (1.0 / n_total)


def accuracy(output, target, *, max_rows_per_tile=2048,
             target_block_bytes=4 * 1024 * 1024):
    """output: (N, C) float logits, target: (N,) int labels -> scalar float32."""
    n, c = output.shape
    itemsize = output.dtype.itemsize

    # Row tile: big enough to amortize per-grid-step overhead and keep the DMA
    # pipeline saturated, small enough that 2x (double-buffered) logits blocks
    # stay well under the scoped-VMEM limit on every TPU generation (v7x incl).
    rows = max(8, target_block_bytes // max(1, c * itemsize))
    rows = min(rows, max_rows_per_tile, _round_up(n, 8))
    tile_n = max(8, (rows // 8) * 8)                 # keep second-minor % 8 == 0

    num_tiles = pl.cdiv(n, tile_n)

    # Lane-replicate the target so its per-tile DMA is dense and in-kernel
    # loads are unmasked (avoids the (N, 1) lane-width-1 layout entirely).
    target_rep = jax.lax.broadcast_in_dim(
        target.astype(jnp.int32), (n, _LANES), broadcast_dimensions=(0,))

    kernel = functools.partial(_accuracy_kernel, n_total=n)

    cost = pl.CostEstimate(
        flops=3 * n * c,
        transcendentals=0,
        bytes_accessed=n * c * itemsize + n * _LANES * 4 + 4,
    )

    out = pl.pallas_call(
        kernel,
        out_shape=jax.ShapeDtypeStruct((1, 1), jnp.float32),
        grid_spec=pltpu.PrefetchScalarGridSpec(
            num_scalar_prefetch=0,
            grid=(num_tiles,),
            in_specs=[
                pl.BlockSpec((tile_n, c), lambda i: (i, 0)),
                pl.BlockSpec((tile_n, _LANES), lambda i: (i, 0)),
            ],
            out_specs=pl.BlockSpec((1, 1), lambda i: (0, 0)),
            scratch_shapes=[pltpu.VMEM((1, 1), jnp.int32)],
        ),
        compiler_params=pltpu.CompilerParams(
            dimension_semantics=("arbitrary",),
            vmem_limit_bytes=32 * 1024 * 1024,
        ),
        cost_estimate=cost,
    )(output, target_rep)
    return out[0, 0]


if __name__ == "__main__":
    key = jax.random.PRNGKey(0)
    k1, k2, k3, k4 = jax.random.split(key, 4)

    # Small shapes consistent with the module: batch=8, classes=32.
    N, C = 8, 32
    logits = jax.random.normal(k1, (N, C), dtype=jnp.float32)
    target = jax.random.randint(k2, (N,), 0, C, dtype=jnp.int32)

    acc = accuracy(logits, target)
    jax.block_until_ready(acc)
    ref = jnp.mean((jnp.argmax(logits, axis=1) == target).astype(jnp.float32))
    assert jnp.allclose(acc, ref), (acc, ref)

    # Exercise the multi-tile + ragged-last-tile path.
    N2, C2 = 1000, 10
    logits2 = jax.random.normal(k3, (N2, C2), dtype=jnp.float32)
    target2 = jax.random.randint(k4, (N2,), 0, C2, dtype=jnp.int32)
    acc2 = accuracy(logits2, target2, max_rows_per_tile=256)
    jax.block_until_ready(acc2)
    ref2 = jnp.mean((jnp.argmax(logits2, axis=1) == target2).astype(jnp.float32))
    assert jnp.allclose(acc2, ref2), (acc2, ref2)

    print("KERNEL_OK")
</pallas_src>

<mosaic_0001>
module attributes {stable_mosaic.version = 11 : i64} {
  func.func @_accuracy_kernel(%arg0: i32, %arg1: memref<8x32xf32, #tpu.memory_space<vmem>>, %arg2: memref<8x128xi32, #tpu.memory_space<vmem>>, %arg3: memref<1x1xf32, #tpu.memory_space<vmem>>, %arg4: memref<1x1xi32, #tpu.memory_space<vmem>>) attributes {dimension_semantics = [#tpu.dimension_semantics<arbitrary>], iteration_bounds = array<i64: 1>, scalar_prefetch = 0 : i64, scratch_operands = 1 : i64, tpu.core_type = #tpu.core_type<tc>, window_params = [{transform_indices = @transform_0, window_bounds = array<i64: 8, 32>}, {transform_indices = @transform_1, window_bounds = array<i64: 8, 128>}, {pipeline_mode = #tpu.pipeline_mode<synchronous>, transform_indices = @transform_2, window_bounds = array<i64: 1, 1>}]} {
    %c0_i32 = arith.constant 0 : i32
    %0 = arith.cmpi eq, %arg0, %c0_i32 : i32
    %1 = arith.extui %0 : i1 to i32
    %c0_i32_0 = arith.constant 0 : i32
    %2 = arith.cmpi ne, %1, %c0_i32_0 : i32
    scf.if %2 {
      %c0_i32_13 = arith.constant 0 : i32
      %31 = vector.broadcast %c0_i32_13 : i32 to vector<1x1xi32>
      %c0_14 = arith.constant 0 : index
      %c0_15 = arith.constant 0 : index
      %32 = vector.load %arg4[%c0_14, %c0_15] : memref<1x1xi32, #tpu.memory_space<vmem>>, vector<1x1xi32>
      tpu.vector_store %arg4[%c0_14, %c0_15], %31 {strides = array<i32>} : memref<1x1xi32, #tpu.memory_space<vmem>>, vector<1x1xi32>,
    } else {
    }
    %c0 = arith.constant 0 : index
    %c0_1 = arith.constant 0 : index
    %3 = vector.load %arg1[%c0, %c0_1] : memref<8x32xf32, #tpu.memory_space<vmem>>, vector<8x32xf32>
    %cst = arith.constant dense<0xFF800000> : vector<8xf32>
    %4 = vector.multi_reduction <maximumf>, %3, %cst [1] : vector<8x32xf32> to vector<8xf32>
    %5 = vector.shape_cast %4 : vector<8xf32> to vector<8x1xf32>
    %6 = tpu.iota {dimensions = array<i32: 1>} : vector<8x32xi32>
    %7 = vector.broadcast %5 : vector<8x1xf32> to vector<8x32xf32>
    %8 = arith.cmpf oeq, %3, %7 : vector<8x32xf32>
    %c32_i32 = arith.constant 32 : i32
    %9 = vector.broadcast %c32_i32 : i32 to vector<8x32xi32>
    %10 = arith.select %8, %6, %9 : vector<8x32xi1>, vector<8x32xi32>
    %cst_2 = arith.constant dense<2147483647> : vector<8xi32>
    %11 = vector.multi_reduction <minsi>, %10, %cst_2 [1] : vector<8x32xi32> to vector<8xi32>
    %12 = vector.shape_cast %11 : vector<8xi32> to vector<8x1xi32>
    %c0_3 = arith.constant 0 : index
    %c0_4 = arith.constant 0 : index
    %13 = vector.load %arg2[%c0_3, %c0_4] : memref<8x128xi32, #tpu.memory_space<vmem>>, vector<8x1xi32>
    %14 = tpu.iota {dimensions = array<i32: 0>} : vector<8x1xi32>
    %c8_i32 = arith.constant 8 : i32
    %15 = arith.muli %arg0, %c8_i32 : i32
    %16 = vector.broadcast %15 : i32 to vector<8x1xi32>
    %17 = arith.addi %16, %14 : vector<8x1xi32>
    %c8_i32_5 = arith.constant 8 : i32
    %18 = vector.broadcast %c8_i32_5 : i32 to vector<8x1xi32>
    %19 = arith.cmpi slt, %17, %18 : vector<8x1xi32>
    %20 = arith.cmpi eq, %12, %13 : vector<8x1xi32>
    %21 = arith.andi %19, %20 : vector<8x1xi1>
    %22 = arith.extui %21 : vector<8x1xi1> to vector<8x1xi32>
    %c0_6 = arith.constant 0 : index
    %c0_7 = arith.constant 0 : index
    %23 = vector.load %arg4[%c0_6, %c0_7] : memref<1x1xi32, #tpu.memory_space<vmem>>, vector<1x1xi32>
    %cst_8 = arith.constant dense<0> : vector<1xi32>
    %24 = vector.multi_reduction <add>, %22, %cst_8 [0] : vector<8x1xi32> to vector<1xi32>
    %25 = vector.shape_cast %24 : vector<1xi32> to vector<1x1xi32>
    %26 = arith.addi %23, %25 : vector<1x1xi32>
    %c0_9 = arith.constant 0 : index
    %c0_10 = arith.constant 0 : index
    %27 = vector.load %arg4[%c0_9, %c0_10] : memref<1x1xi32, #tpu.memory_space<vmem>>, vector<1x1xi32>
    tpu.vector_store %arg4[%c0_9, %c0_10], %26 {strides = array<i32>} : memref<1x1xi32, #tpu.memory_space<vmem>>, vector<1x1xi32>,
    %c0_i32_11 = arith.constant 0 : i32
    %28 = arith.cmpi eq, %arg0, %c0_i32_11 : i32
    %29 = arith.extui %28 : i1 to i32
    %c0_i32_12 = arith.constant 0 : i32
    %30 = arith.cmpi ne, %29, %c0_i32_12 : i32
    scf.if %30 {
      %c0_13 = arith.constant 0 : index
      %c0_14 = arith.constant 0 : index
      %31 = vector.load %arg4[%c0_13, %c0_14] : memref<1x1xi32, #tpu.memory_space<vmem>>, vector<1x1xi32>
      %32 = arith.sitofp %31 : vector<1x1xi32> to vector<1x1xf32>
      %cst_15 = arith.constant 1.250000e-01 : f32
      %33 = vector.broadcast %cst_15 : f32 to vector<1x1xf32>
      %34 = arith.mulf %32, %33 : vector<1x1xf32>
      %c0_16 = arith.constant 0 : index
      %c0_17 = arith.constant 0 : index
      %35 = vector.load %arg3[%c0_16, %c0_17] : memref<1x1xf32, #tpu.memory_space<vmem>>, vector<1x1xf32>
      tpu.vector_store %arg3[%c0_16, %c0_17], %34 {strides = array<i32>} : memref<1x1xf32, #tpu.memory_space<vmem>>, vector<1x1xf32>,
    } else {
    }
    return
  }
  func.func @transform_0(%arg0: i32) -> (i32, i32) {
    %c0_i32 = arith.constant 0 : i32
    %c0_i32_0 = arith.constant 0 : i32
    return %arg0, %c0_i32 : i32, i32
  }
  func.func @transform_1(%arg0: i32) -> (i32, i32) {
    %c0_i32 = arith.constant 0 : i32
    %c0_i32_0 = arith.constant 0 : i32
    return %arg0, %c0_i32 : i32, i32
  }
  func.func @transform_2(%arg0: i32) -> (i32, i32) {
    %c0_i32 = arith.constant 0 : i32
    %c0_i32_0 = arith.constant 0 : i32
    %c0_i32_1 = arith.constant 0 : i32
    return %c0_i32, %c0_i32_0 : i32, i32
  }
}

</mosaic_0001>

<llo_original>
// kernel: tpu_custom_call.1
$region0: #{tpu_custom_call.1}
  #allocation0 [shape = 'u32[]', space=smem, size = 0x4, offset = 0x4, fixed_abs, tag = 'smem constant byte address 0x4 - core index']
  #allocation1 [shape = 'u32[144,128]{1,0:T(1,128)}', space=vmem, size = 0x12000, scoped, tag = 'internal scratch']
  #allocation2 [shape = 's32[1,1]{1,0:T(1,128)}', space=vmem, size = 0x200, scoped, tag = 'scratch operand']
  %s0 = inlined_call_operand.hbm [shape: f32[8,32], index: 0, kind: input, shape index: {}]
  %s1 = inlined_call_operand.hbm [shape: s32[8,128], index: 1, kind: input, shape index: {}]
  %s2 = inlined_call_operand.hbm [shape: f32[1,1], index: 2, kind: output, shape index: {}]
  %s3 = sld [smem:[#allocation0]]
  $region34: #{tpu_custom_call.1} parent=0
    _
  %s5 = ssub.s32 1, %s3
  %s6 = scalar_select 0, %s5, %s3
  $region1: #{tpu_custom_call.1} parent=0
    #allocation3 [shape = 'u8[4096]{0}', space=vmem, size = 0x1000, scoped, tag = 'input window, operand 0, single buffered']
    #allocation4 [shape = 's32[1]{0}', space=sflag, size = 0x4, scoped, tag = 'scoped memory for tpu_custom_call.1']
    #allocation5 [shape = 's32[1]{0}', space=sflag, size = 0x4, scoped, tag = 'scoped memory for tpu_custom_call.1']
    #allocation6 [shape = 'u8[4096]{0}', space=vmem, size = 0x1000, scoped, tag = 'input window, operand 1, single buffered']
    #allocation7 [shape = 's32[1]{0}', space=sflag, size = 0x4, scoped, tag = 'scoped memory for tpu_custom_call.1']
    #allocation8 [shape = 'u8[512]{0}', space=vmem, size = 0x400, scoped, tag = 'output window, operand 0, single buffered']
    %7 = vsyncpa [#allocation4], 0
    %8 = vsyncpa [#allocation7], 0
    %9 = vsyncpa [#allocation5], 0
    // Predicated region
    $region2: #{tpu_custom_call.1} parent=1 // pred_check
      _
    $region3: #{tpu_custom_call.1} parent=1 // pred_check_branch
      %11 = sbr.rel (0) target = $region5
    $region4: #{tpu_custom_call.1} parent=1 // pred_region
      %s13 = ssub.s32 128, 128
      %14 = vsyncadd [#allocation4], %s13
      %s16 = sshll.u32 [#allocation3], 4
      %s17 = int_to_ptr.vmem [resolvable:$true] %s16
      %19 = dma.hbm_to_vmem [thread:$0]  %s0, 128, %s17, [#allocation4]
    $region5: #{tpu_custom_call.1} parent=1 // pred_fallthru
      _
    // Predicated region
    $region6: #{tpu_custom_call.1} parent=1 // pred_check
      _
    $region7: #{tpu_custom_call.1} parent=1 // pred_check_branch
      %21 = sbr.rel (0) target = $region9
    $region8: #{tpu_custom_call.1} parent=1 // pred_region
      %s23 = ssub.s32 128, 128
      %24 = vsyncadd [#allocation7], %s23
      %s26 = sshll.u32 [#allocation6], 4
      %s27 = int_to_ptr.vmem [resolvable:$true] %s26
      %29 = dma.hbm_to_vmem [thread:$0]  %s1, 128, %s27, [#allocation7]
    $region9: #{tpu_custom_call.1} parent=1 // pred_fallthru
      _
    // Predicated region
    $region10: #{tpu_custom_call.1} parent=1 // pred_check
      _
    $region11: #{tpu_custom_call.1} parent=1 // pred_check_branch
      %31 = sbr.rel (0) target = $region13
    $region12: #{tpu_custom_call.1} parent=1 // pred_region
      %32 = dma.done [#allocation4], 128
    $region13: #{tpu_custom_call.1} parent=1 // pred_fallthru
      _
    // Predicated region
    $region14: #{tpu_custom_call.1} parent=1 // pred_check
      _
    $region15: #{tpu_custom_call.1} parent=1 // pred_check_branch
      %34 = sbr.rel (0) target = $region17
    $region16: #{tpu_custom_call.1} parent=1 // pred_region
      %35 = dma.done [#allocation7], 128
    $region17: #{tpu_custom_call.1} parent=1 // pred_fallthru
      _
    %p36 = scmp.eq.s32.totalorder 0, 0
    // Predicated region
    $region18: #{tpu_custom_call.1} parent=1 // pred_check
      %p37 = pneg %p36
    $region19: #{tpu_custom_call.1} parent=1 // pred_check_branch
      %39 = sbr.rel (%p37) target = $region21
    $region20: #{tpu_custom_call.1} parent=1 // pred_region
      %vm40 = vcmask 0
      %41 = vst.msk [vmem:[#allocation2] sm:$0x1] %vm40, 0
    $region21: #{tpu_custom_call.1} parent=1 // pred_fallthru
      _
    %v42 = vld [vmem:[#allocation3] sm:$0xff]
    %vm43 = vcmask 261120
    %v44 = vsel %vm43, %v42, -inf
    %45 = vmax.xlane.f32.xlu0 %v44
    %v46 = vpop.xlane.xlu0 %45
    %v47 = vlaneseq
    %v48 = vand.u32 %v47, 127
    %vm49 = vcmp.eq.f32.partialorder %v42, %v46
    %v50 = vsel %vm49, %v48, 32
    %v51 = vsel %vm43, %v50, 2147483647
    %v52 = vand.u32 %v51, 65535
    %v53 = vshra.s32 %v51, 16
    %v54 = vcvt.s32.f32 %v52
    %v55 = vcvt.s32.f32 %v53
    %56 = vmin.xlane.f32.xlu0 %v55
    %v57 = vpop.xlane.xlu0 %56
    %vm58 = vcmp.eq.f32.partialorder %v55, %v57
    %v59 = vsel %vm58, %v54, inf
    %60 = vmin.xlane.f32.xlu0 %v59
    %v61 = vpop.xlane.xlu0 %60
    %v62 = vcvt.f32.s32 %v61
    %v63 = vcvt.f32.s32 %v57
    %v64 = vshll.u32 %v63, 16
    %v65 = vadd.s32 %v64, %v62
    %v66 = vld [vmem:[#allocation6] sm:$0xff]
    %v67 = vlaneseq
    %v68 = vshrl.u32 %v67, 7
    %s69 = smul.u32 0, 8
    %v70 = vstv %s69
    %v71 = vadd.s32 %v70, %v68
    %vm72 = vcmp.lt.s32.totalorder %v71, 8
    %vm73 = vcmp.eq.s32.totalorder %v65, %v66
    %vm74 = vmand %vm72, %vm73
    %v75 = vsel %vm74, 1, 0
    %v76 = vld [vmem:[#allocation2] sm:$0x1]
    %vm77 = vcmask 7168
    %v78 = vsel %vm77, %v75, 0
    %v79 = vrot.slane %v78, 4
    %v80 = vadd.s32 %v78, %v79
    %v81 = vrot.slane %v80, 2
    %v82 = vadd.s32 %v80, %v81
    %v83 = vrot.slane %v82, 1
    %v84 = vadd.s32 %v82, %v83
    %v85 = vadd.s32 %v76, %v84
    %vm86 = vcmask 0
    %87 = vst.msk [vmem:[#allocation2] sm:$0x1] %vm86, %v85
    // Predicated region
    $region22: #{tpu_custom_call.1} parent=1 // pred_check
      %p88 = pneg %p36
    $region23: #{tpu_custom_call.1} parent=1 // pred_check_branch
      %90 = sbr.rel (%p88) target = $region25
    $region24: #{tpu_custom_call.1} parent=1 // pred_region
      %v91 = vld [vmem:[#allocation2] sm:$0x1]
      %v92 = vcvt.s32.f32 %v91
      %v93 = vmul.f32 %v92, 0.125
      %94 = vst.msk [vmem:[#allocation8] sm:$0x1] %vm86, %v93
    $region25: #{tpu_custom_call.1} parent=1 // pred_fallthru
      _
    // Predicated region
    $region26: #{tpu_custom_call.1} parent=1 // pred_check
      _
    $region27: #{tpu_custom_call.1} parent=1 // pred_check_branch
      %96 = sbr.rel (0) target = $region29
    $region28: #{tpu_custom_call.1} parent=1 // pred_region
      %s98 = ssub.s32 16, 16
      %99 = vsyncadd [#allocation5], %s98
      %s101 = sshll.u32 [#allocation8], 4
      %s102 = int_to_ptr.vmem [resolvable:$true] %s101
      %104 = dma.vmem_to_hbm [thread:$0]  %s102, 16, %s2, [#allocation5]
    $region29: #{tpu_custom_call.1} parent=1 // pred_fallthru
      _
    // Predicated region
    $region30: #{tpu_custom_call.1} parent=1 // pred_check
      _
    $region31: #{tpu_custom_call.1} parent=1 // pred_check_branch
      %106 = sbr.rel (0) target = $region33
    $region32: #{tpu_custom_call.1} parent=1 // pred_region
      %107 = dma.done [#allocation5], 16
    $region33: #{tpu_custom_call.1} parent=1 // pred_fallthru
      _
    %108 = vsyncpa [#allocation4], 1
    %109 = vsyncpa [#allocation7], 1
    %110 = vsyncpa [#allocation5], 1

</llo_original>
